<compile_context>
chip_gen: v6e
topology: v6e:2x2x1
jax: 0.10.0
libtpu: 0.0.40
codegen_flags: <defaults>
</compile_context>

<pallas_src>
import functools

import jax
import jax.numpy as jnp
from jax.experimental import pallas as pl
from jax.experimental.pallas import tpu as pltpu

_LANES = 128
_SUBLANES = 8


def _round_up(v: int, m: int) -> int:
    return ((v + m - 1) // m) * m


def _vmem_budget_bytes() -> int:
    """Scoped-VMEM budget that is safe on every TPU generation."""
    try:
        phys = pltpu.get_tpu_info().vmem_capacity_bytes
    except Exception:
        phys = 64 << 20  # v7x has the smallest physical VMEM per TensorCore
    return min(32 << 20, phys // 2)


def _dot_kernel(alpha_ref, x_ref, o_ref, *, tile_r, rows, tiles_per_core, need_mask):
    j = pl.program_id(1)  # reduction axis ("arbitrary")

    # The output block is resident across the reduction axis: zero it on the
    # first step of this core's range; Pallas writes it back to HBM only when
    # the block index (the parallel axis) changes.
    @pl.when(j == 0)
    def _():
        o_ref[...] = jnp.zeros_like(o_ref)

    prod = alpha_ref[...].astype(jnp.float32) * x_ref[...].astype(jnp.float32)

    if need_mask:
        # Kill rows past the logical end of the vectors: the ragged last block
        # (block shape does not divide `rows`) and the duplicated, clamped
        # blocks generated by the 2-core split.  jnp.where (not a multiply) so
        # garbage/NaN padding cannot leak through.
        block_idx = pl.program_id(0) * tiles_per_core + j
        row0 = block_idx * tile_r
        row_ids = row0 + jax.lax.broadcasted_iota(jnp.int32, (tile_r, 1), 0)
        prod = jnp.where(row_ids < rows, prod, 0.0)

    # Pure-VPU partial reduction: collapse groups of 8 rows (one f32 vreg each)
    # onto the resident (8, 128) lane-dense accumulator.  The final XLU-style
    # reduction to a scalar happens once, in the wrapper.
    o_ref[...] += prod.reshape(tile_r // _SUBLANES, _SUBLANES, _LANES).sum(axis=0)


def weights_model_forward(
    alpha: jax.Array,
    x: jax.Array,
    *,
    max_tile_rows: int = 8192,
    small_dim_fallback: int = 4096,
) -> jax.Array:
    """Equivalent of WeightsModel.forward: torch.dot(alpha, x) -> scalar."""
    assert alpha.ndim == 1 and x.ndim == 1 and alpha.shape == x.shape
    dim = alpha.shape[0]
    out_dtype = jnp.result_type(alpha.dtype, x.dtype)

    # Tiny inputs: pallas_call dispatch + pipeline prologue dwarf the work.
    if dim <= small_dim_fallback:
        return jnp.dot(alpha, x).astype(out_dtype)

    # Lane-dense repack: rows of 128 lanes.  For 128-aligned dims this reshape
    # is a free metadata op — no extra HBM traffic.
    rem = dim % _LANES
    if rem:
        # TODO(synk): a fully pad-free path for dim % 128 != 0 would need a
        # manual tail DMA; this <=127-element zero-pad still costs one extra
        # HBM round trip of both inputs when dim is not 128-aligned.
        alpha = jnp.pad(alpha, (0, _LANES - rem))
        x = jnp.pad(x, (0, _LANES - rem))
    rows = alpha.shape[0] // _LANES
    alpha2d = alpha.reshape(rows, _LANES)
    x2d = x.reshape(rows, _LANES)

    # Tile rows: as large as the scoped-VMEM budget allows (2 inputs x 2
    # pipeline buffers, ~25% headroom), capped by max_tile_rows, rounded to the
    # packed-sublane multiple for the input dtype (8 f32 / 16 bf16 / 32 int8).
    itemsize = max(jnp.dtype(alpha.dtype).itemsize, jnp.dtype(x.dtype).itemsize)
    sub_mult = _SUBLANES * max(1, 4 // itemsize)
    vmem_budget = _vmem_budget_bytes()
    rows_by_vmem = (vmem_budget * 3 // 4) // (2 * 2 * _LANES * itemsize)
    tile_r = min(max_tile_rows, rows_by_vmem, _round_up(rows, sub_mult))
    tile_r = max(sub_mult, (tile_r // sub_mult) * sub_mult)

    num_tiles = pl.cdiv(rows, tile_r)
    split = 2 if num_tiles >= 2 else 1           # use both TCs on v7x
    tiles_per_core = pl.cdiv(num_tiles, split)
    need_clamp = split * tiles_per_core != num_tiles
    need_mask = need_clamp or (rows % tile_r != 0)

    def in_map(c, j):
        b = c * tiles_per_core + j
        if need_clamp:
            # Keep the DMA in-bounds; the duplicated block is masked in-kernel.
            b = jnp.minimum(b, num_tiles - 1)
        return (b, 0)

    kernel = functools.partial(
        _dot_kernel,
        tile_r=tile_r,
        rows=rows,
        tiles_per_core=tiles_per_core,
        need_mask=need_mask,
    )

    partials = pl.pallas_call(
        kernel,
        out_shape=jax.ShapeDtypeStruct((split * _SUBLANES, _LANES), jnp.float32),
        grid=(split, tiles_per_core),
        in_specs=[
            pl.BlockSpec((tile_r, _LANES), in_map),
            pl.BlockSpec((tile_r, _LANES), in_map),
        ],
        out_specs=pl.BlockSpec((_SUBLANES, _LANES), lambda c, j: (c, 0)),
        compiler_params=pltpu.CompilerParams(
            dimension_semantics=("parallel", "arbitrary"),
            vmem_limit_bytes=vmem_budget,
        ),
    )(alpha2d, x2d)

    # One tiny fused XLA reduction of the lane-dense per-core partials.
    return jnp.sum(partials).astype(out_dtype)


def _expect(name, got, want, atol):
    if not jnp.allclose(got, want, atol=atol, rtol=1e-4):
        raise AssertionError(f"{name}: got={got} want={want}")


if __name__ == "__main__":
    key = jax.random.PRNGKey(0)
    k1, k2, k3, k4 = jax.random.split(key, 4)

    # Module default: dim=128, alpha initialised like nn.Parameter(torch.ones(dim)).
    dim = 128
    alpha = jnp.ones((dim,), jnp.float32)
    x = jax.random.normal(k1, (dim,), jnp.float32)
    y = weights_model_forward(alpha, x, small_dim_fallback=0)  # force the Pallas path
    jax.block_until_ready(y)
    _expect("dim=128", y, jnp.dot(alpha, x), atol=1e-4)

    # 128-aligned, single large tile, no padding, default settings.
    dim = 32768
    alpha = jnp.ones((dim,), jnp.float32)
    x = jax.random.normal(k2, (dim,), jnp.float32)
    y = weights_model_forward(alpha, x)
    jax.block_until_ready(y)
    _expect("dim=32768", y, jnp.dot(alpha, x), atol=3e-2)

    # Non-128-aligned dim + forced multi-tile grid (odd tile count -> clamp + mask).
    dim = 3000
    alpha = jax.random.normal(k3, (dim,), jnp.float32)
    x = jax.random.normal(k4, (dim,), jnp.float32)
    y = weights_model_forward(alpha, x, max_tile_rows=8, small_dim_fallback=0)
    jax.block_until_ready(y)
    _expect("dim=3000", y, jnp.dot(alpha, x), atol=1e-2)

    # 128-aligned, even multi-tile grid split across the parallel (core) axis.
    dim = 8192
    alpha = jnp.ones((dim,), jnp.float32)
    x = jax.random.normal(k1, (dim,), jnp.float32)
    y = weights_model_forward(alpha, x, max_tile_rows=16, small_dim_fallback=0)
    jax.block_until_ready(y)
    _expect("dim=8192", y, jnp.dot(alpha, x), atol=1e-2)

    # Tiny-dim short circuit (no Pallas dispatch, XLA-fused dot).
    dim = 100
    alpha = jnp.ones((dim,), jnp.float32)
    x = jax.random.normal(k2, (dim,), jnp.float32)
    y = weights_model_forward(alpha, x)
    jax.block_until_ready(y)
    _expect("dim=100", y, jnp.dot(alpha, x), atol=1e-4)

    print("KERNEL_OK")
</pallas_src>

<mosaic_0001>
module attributes {stable_mosaic.version = 11 : i64} {
  func.func @_dot_kernel(%arg0: i32, %arg1: i32, %arg2: memref<8x128xf32, #tpu.memory_space<vmem>>, %arg3: memref<8x128xf32, #tpu.memory_space<vmem>>, %arg4: memref<8x128xf32, #tpu.memory_space<vmem>>) attributes {dimension_semantics = [#tpu.dimension_semantics<parallel>, #tpu.dimension_semantics<arbitrary>], iteration_bounds = array<i64: 1, 1>, scalar_prefetch = 0 : i64, scratch_operands = 0 : i64, tpu.core_type = #tpu.core_type<tc>, window_params = [{transform_indices = @transform_0, window_bounds = array<i64: 8, 128>}, {transform_indices = @transform_1, window_bounds = array<i64: 8, 128>}, {transform_indices = @transform_2, window_bounds = array<i64: 8, 128>}]} {
    %c0_i32 = arith.constant 0 : i32
    %0 = arith.cmpi eq, %arg1, %c0_i32 : i32
    %1 = arith.extui %0 : i1 to i32
    %c0_i32_0 = arith.constant 0 : i32
    %2 = arith.cmpi ne, %1, %c0_i32_0 : i32
    scf.if %2 {
      %cst_10 = arith.constant 0.000000e+00 : f32
      %23 = vector.broadcast %cst_10 : f32 to vector<8x128xf32>
      %c0_11 = arith.constant 0 : index
      %c0_12 = arith.constant 0 : index
      %24 = vector.load %arg4[%c0_11, %c0_12] : memref<8x128xf32, #tpu.memory_space<vmem>>, vector<8x128xf32>
      tpu.vector_store %arg4[%c0_11, %c0_12], %23 {strides = array<i32>} : memref<8x128xf32, #tpu.memory_space<vmem>>, vector<8x128xf32>,
    } else {
    }
    %c0 = arith.constant 0 : index
    %c0_1 = arith.constant 0 : index
    %3 = vector.load %arg2[%c0, %c0_1] : memref<8x128xf32, #tpu.memory_space<vmem>>, vector<8x128xf32>
    %c0_2 = arith.constant 0 : index
    %c0_3 = arith.constant 0 : index
    %4 = vector.load %arg3[%c0_2, %c0_3] : memref<8x128xf32, #tpu.memory_space<vmem>>, vector<8x128xf32>
    %5 = arith.mulf %3, %4 : vector<8x128xf32>
    %c1_i32 = arith.constant 1 : i32
    %6 = arith.muli %arg0, %c1_i32 : i32
    %7 = arith.addi %6, %arg1 : i32
    %c8_i32 = arith.constant 8 : i32
    %8 = arith.muli %7, %c8_i32 : i32
    %9 = tpu.iota {dimensions = array<i32: 0>} : vector<8x1xi32>
    %10 = vector.broadcast %8 : i32 to vector<8x1xi32>
    %11 = arith.addi %10, %9 : vector<8x1xi32>
    %c1_i32_4 = arith.constant 1 : i32
    %12 = vector.broadcast %c1_i32_4 : i32 to vector<8x1xi32>
    %13 = arith.cmpi slt, %11, %12 : vector<8x1xi32>
    %cst = arith.constant 0.000000e+00 : f32
    %14 = vector.shape_cast %13 : vector<8x1xi1> to vector<8x1xi1>
    %15 = vector.broadcast %14 : vector<8x1xi1> to vector<8x128xi1>
    %16 = vector.broadcast %cst : f32 to vector<8x128xf32>
    %17 = arith.select %15, %5, %16 : vector<8x128xi1>, vector<8x128xf32>
    %c0_5 = arith.constant 0 : index
    %c0_6 = arith.constant 0 : index
    %18 = vector.load %arg4[%c0_5, %c0_6] : memref<8x128xf32, #tpu.memory_space<vmem>>, vector<8x128xf32>
    %19 = vector.shape_cast %17 : vector<8x128xf32> to vector<1x8x128xf32>
    %cst_7 = arith.constant dense<0.000000e+00> : vector<8x128xf32>
    %20 = vector.multi_reduction <add>, %19, %cst_7 [0] : vector<1x8x128xf32> to vector<8x128xf32>
    %21 = arith.addf %18, %20 : vector<8x128xf32>
    %c0_8 = arith.constant 0 : index
    %c0_9 = arith.constant 0 : index
    %22 = vector.load %arg4[%c0_8, %c0_9] : memref<8x128xf32, #tpu.memory_space<vmem>>, vector<8x128xf32>
    tpu.vector_store %arg4[%c0_8, %c0_9], %21 {strides = array<i32>} : memref<8x128xf32, #tpu.memory_space<vmem>>, vector<8x128xf32>,
    return
  }
  func.func @transform_0(%arg0: i32, %arg1: i32) -> (i32, i32) {
    %c1_i32 = arith.constant 1 : i32
    %0 = arith.muli %arg0, %c1_i32 : i32
    %1 = arith.addi %0, %arg1 : i32
    %c0_i32 = arith.constant 0 : i32
    %c0_i32_0 = arith.constant 0 : i32
    return %1, %c0_i32 : i32, i32
  }
  func.func @transform_1(%arg0: i32, %arg1: i32) -> (i32, i32) {
    %c1_i32 = arith.constant 1 : i32
    %0 = arith.muli %arg0, %c1_i32 : i32
    %1 = arith.addi %0, %arg1 : i32
    %c0_i32 = arith.constant 0 : i32
    %c0_i32_0 = arith.constant 0 : i32
    return %1, %c0_i32 : i32, i32
  }
  func.func @transform_2(%arg0: i32, %arg1: i32) -> (i32, i32) {
    %c0_i32 = arith.constant 0 : i32
    %c0_i32_0 = arith.constant 0 : i32
    return %arg0, %c0_i32 : i32, i32
  }
}

</mosaic_0001>

<llo_original>
// kernel: tpu_custom_call.1
$region0: #{tpu_custom_call.1}
  #allocation0 [shape = 'u32[]', space=smem, size = 0x4, offset = 0x4, fixed_abs, tag = 'smem constant byte address 0x4 - core index']
  #allocation1 [shape = 'u32[144,128]{1,0:T(1,128)}', space=vmem, size = 0x12000, scoped, tag = 'internal scratch']
  %s0 = inlined_call_operand.hbm [shape: f32[1,128], index: 0, kind: input, shape index: {}]
  %s1 = inlined_call_operand.vmem [shape: f32[1,128], index: 1, kind: input, shape index: {}]
  %s2 = inlined_call_operand.hbm [shape: f32[8,128], index: 2, kind: output, shape index: {}]
  %s3 = sld [smem:[#allocation0]]
  $region26: #{tpu_custom_call.1} parent=0
    _
  %s5 = ssub.s32 1, %s3
  %s6 = scalar_select 0, %s5, %s3
  $region1: #{tpu_custom_call.1} parent=0
    #allocation2 [shape = 'u8[4096]{0}', space=vmem, size = 0x1000, scoped, tag = 'input window, operand 0, single buffered']
    #allocation3 [shape = 's32[1]{0}', space=sflag, size = 0x4, scoped, tag = 'scoped memory for tpu_custom_call.1']
    #allocation4 [shape = 's32[1]{0}', space=sflag, size = 0x4, scoped, tag = 'scoped memory for tpu_custom_call.1']
    #allocation5 [shape = 'u8[4096]{0}', space=vmem, size = 0x1000, scoped, tag = 'output window, operand 0, single buffered']
    %7 = vsyncpa [#allocation3], 0
    %8 = vsyncpa [#allocation4], 0
    // Predicated region
    $region2: #{tpu_custom_call.1} parent=1 // pred_check
      _
    $region3: #{tpu_custom_call.1} parent=1 // pred_check_branch
      %10 = sbr.rel (0) target = $region5
    $region4: #{tpu_custom_call.1} parent=1 // pred_region
      %s11 = sadd.s32 0, 0
      %s12 = smul.u32 8, %s11
      %s13 = ssub.s32 1, %s12
      %s14 = smul.u32 16, %s13
      %s16 = ssub.s32 128, %s14
      %17 = vsyncadd [#allocation3], %s16
      %p18 = scmp.ne.s32.totalorder 0, %s14
      %s19 = smul.addr %s12, 16
      %s20 = scalar_lea.hbm %s0, %s19
      %s21 = sshll.u32 [#allocation2], 4
      %s22 = int_to_ptr.vmem [resolvable:$true] %s21
      %s23 = sshll.u32 %s13, 4
      %27 = dma.hbm_to_vmem [thread:$0]  (%p18), %s20, %s23, %s22, [#allocation3], 16, 16, 1
    $region5: #{tpu_custom_call.1} parent=1 // pred_fallthru
      _
    // Predicated region
    $region6: #{tpu_custom_call.1} parent=1 // pred_check
      _
    $region7: #{tpu_custom_call.1} parent=1 // pred_check_branch
      %29 = sbr.rel (0) target = $region9
    $region8: #{tpu_custom_call.1} parent=1 // pred_region
      %s30 = sadd.s32 0, 0
      %s31 = smul.u32 8, %s30
      %s32 = ssub.s32 1, %s31
      %s33 = smul.u32 16, %s32
      %p34 = scmp.lt.s32.totalorder %s31, 0
      %s35 = scalar_select %p34, %s31, 0
      %s36 = scalar_lea.vmem %s1, %s35
      %s37 = sadd.s32 0, 0
      %s38 = smul.u32 8, %s37
      %s39 = ssub.s32 1, %s38
      %s40 = smul.u32 16, %s39
    $region9: #{tpu_custom_call.1} parent=1 // pred_fallthru
      _
    // Predicated region
    $region10: #{tpu_custom_call.1} parent=1 // pred_check
      _
    $region11: #{tpu_custom_call.1} parent=1 // pred_check_branch
      %42 = sbr.rel (0) target = $region13
    $region12: #{tpu_custom_call.1} parent=1 // pred_region
      %43 = dma.done [#allocation3], 128
    $region13: #{tpu_custom_call.1} parent=1 // pred_fallthru
      _
    %s44 = sadd.s32 0, 0
    %s45 = smul.u32 8, %s44
    %s46 = ssub.s32 1, %s45
    %s47 = smul.u32 16, %s46
    %p48 = scmp.lt.s32.totalorder %s45, 0
    %s49 = scalar_select %p48, %s45, 0
    %s50 = scalar_lea.vmem %s1, %s49
    %s51 = sadd.s32 0, 0
    %s52 = smul.u32 8, %s51
    %s53 = ssub.s32 1, %s52
    %s54 = smul.u32 16, %s53
    %s55 = sadd.s32 0, 0
    %s56 = smul.u32 8, %s55
    %s57 = ssub.s32 1, %s56
    %s58 = smul.u32 16, %s57
    %p59 = scmp.lt.s32.totalorder %s56, 0
    %s60 = scalar_select %p59, %s56, 0
    %s61 = scalar_lea.vmem %s1, %s60
    %s62 = sadd.s32 0, 0
    %s63 = smul.u32 8, %s62
    %s64 = ssub.s32 1, %s63
    %s65 = smul.u32 16, %s64
    %p66 = scmp.eq.s32.totalorder 0, 0
    // Predicated region
    $region14: #{tpu_custom_call.1} parent=1 // pred_check
      %p67 = pneg %p66
    $region15: #{tpu_custom_call.1} parent=1 // pred_check_branch
      %69 = sbr.rel (%p67) target = $region17
    $region16: #{tpu_custom_call.1} parent=1 // pred_region
      %70 = vst [vmem:[#allocation5] sm:$0xff] 0.0
    $region17: #{tpu_custom_call.1} parent=1 // pred_fallthru
      _
    %v71 = vld [vmem:[#allocation2] sm:$0xff]
    %v72 = vld [vmem:[%s61] sm:$0xff]
    %v73 = vmul.f32 %v71, %v72
    %s74 = sadd.s32 0, 0
    %s75 = smul.u32 %s74, 8
    %v76 = vlaneseq
    %v77 = vshrl.u32 %v76, 7
    %v78 = vstv %s75
    %v79 = vadd.s32 %v78, %v77
    %vm80 = vcmp.lt.s32.totalorder %v79, 1
    %v81 = vsel %vm80, 1, 0
    %vm82 = vcmp.eq.s32.totalorder %v81, 1
    %v83 = vsel %vm82, %v73, 0.0
    %v84 = vld [vmem:[#allocation5] sm:$0xff]
    %v85 = vadd.f32 %v83, 0.0
    %v86 = vadd.f32 %v84, %v85
    %87 = vst [vmem:[#allocation5] sm:$0xff] %v86
    // Predicated region
    $region18: #{tpu_custom_call.1} parent=1 // pred_check
      _
    $region19: #{tpu_custom_call.1} parent=1 // pred_check_branch
      %89 = sbr.rel (0) target = $region21
    $region20: #{tpu_custom_call.1} parent=1 // pred_region
      %s91 = ssub.s32 128, 128
      %92 = vsyncadd [#allocation4], %s91
      %s94 = sshll.u32 [#allocation5], 4
      %s95 = int_to_ptr.vmem [resolvable:$true] %s94
      %97 = dma.vmem_to_hbm [thread:$0]  %s95, 128, %s2, [#allocation4]
    $region21: #{tpu_custom_call.1} parent=1 // pred_fallthru
      _
    // Predicated region
    $region22: #{tpu_custom_call.1} parent=1 // pred_check
      _
    $region23: #{tpu_custom_call.1} parent=1 // pred_check_branch
      %99 = sbr.rel (0) target = $region25
    $region24: #{tpu_custom_call.1} parent=1 // pred_region
      %100 = dma.done [#allocation4], 128
    $region25: #{tpu_custom_call.1} parent=1 // pred_fallthru
      _
    %101 = vsyncpa [#allocation3], 1
    %102 = vsyncpa [#allocation4], 1

</llo_original>
